<compile_context>
chip_gen: v7x
topology: tpu7x:2x2x1
jax: 0.10.0
libtpu: 0.0.40
codegen_flags: <defaults>
</compile_context>

<pallas_src>
import itertools

import numpy as np
import jax
import jax.numpy as jnp
from jax.experimental import pallas as pl
from jax.experimental.pallas import tpu as pltpu


# ----------------------------------------------------------------------------
# Host-side (NumPy) construction of the partition-algebra diagram basis.
# TODO(synk): set-partition enumeration is inherently host-side combinatorics;
#             it is module-init glue, not a kernel op.
# ----------------------------------------------------------------------------
def _set_partitions(elements):
    """Yield all set partitions of `elements` (list of lists)."""
    if not elements:
        yield []
        return
    first, rest = elements[0], elements[1:]
    for smaller in _set_partitions(rest):
        for i, block in enumerate(smaller):
            yield smaller[:i] + [block + [first]] + smaller[i + 1:]
        yield [[first]] + smaller


def build_basis_matrices(n: int, k: int, l: int, diag: bool = True) -> np.ndarray:
    """Diagram (or orbit) basis of P_k^l(n) as a stack of (n^l, n^k) 0/1 matrices."""
    rows = np.array(list(np.ndindex(*([n] * l))), dtype=np.int32).reshape(n ** l, l)
    cols = np.array(list(np.ndindex(*([n] * k))), dtype=np.int32).reshape(n ** k, k)
    NL, NK = n ** l, n ** k

    def pos_val(pos):
        if pos < l:
            return rows[:, pos][:, None]
        return cols[:, pos - l][None, :]

    mats = []
    for part in _set_partitions(list(range(l + k))):
        ok = np.ones((NL, NK), dtype=bool)
        for block in part:
            ref = pos_val(block[0])
            for pos in block[1:]:
                ok &= (pos_val(pos) == ref)
        if not diag:  # orbit basis
            reps = [pos_val(block[0]) for block in part]
            for a, b in itertools.combinations(range(len(reps)), 2):
                ok &= (reps[a] != reps[b])
        mats.append(ok.astype(np.float32))
    return np.stack(mats, axis=0)   # (P, n^l, n^k)


# ----------------------------------------------------------------------------
# Pallas kernel
# ----------------------------------------------------------------------------
def symm_equiv_kernel(w_ref, x_ref, basis_ref, o_ref, acc_ref, wt_ref):
    c = pl.program_id(0)

    @pl.when(c == 0)
    def _():
        acc_ref[...] = jnp.zeros_like(acc_ref)

    nk, nl = wt_ref.shape

    # Weighted sum of this chunk's transposed+flattened basis matrices:
    # (1, pb) f32 @ (pb, nk*nl) f32 on the MXU. The int8 basis is upcast to
    # f32 on the VPU; the weights stay f32 so the reference tolerance holds.
    wt_flat = jnp.dot(
        w_ref[0], basis_ref[...].astype(jnp.float32),
        preferred_element_type=jnp.float32)                    # (1, nk*nl)

    # Un-flatten W^T_chunk into the (nk, nl) scratch with static lane slices
    # (avoids a lane->sublane jnp.reshape, which Mosaic does not reliably
    # support); scratch-side masked stores are tiny vs. the basis stream.
    for j in range(nk):
        wt_ref[pl.ds(j, 1), :] = wt_flat[:, j * nl:(j + 1) * nl]

    # Accumulate the output every chunk so the MXU overlaps the basis DMA
    # (no serial epilogue, no large (nk, nl) resident accumulator).
    acc_ref[...] += jnp.dot(x_ref[...], wt_ref[...],
                            preferred_element_type=jnp.float32)

    @pl.when(c == pl.num_programs(0) - 1)
    def _():
        o_ref[...] = acc_ref[...].astype(o_ref.dtype)


def build_symm_equiv_forward(basis, *, chunk: int | None = None,
                             vmem_budget_bytes: int = 40 * 2 ** 20):
    """One-time (module-init) basis prep + jitted forward.

    basis: (P, n^l, n^k) 0/1 array.
    Returns (forward, basis_prep) with forward(x, weights, basis_prep) -> (B, n^l).
    """
    basis = np.asarray(basis)
    P, NL, NK = basis.shape
    NKNL = NK * NL

    # Basis rows per grid step: multiple of 32 (int8 sublane packing), sized so
    # the double-buffered int8 block plus its f32 upcast fits the VMEM budget
    # (budget chosen to fit v7x's 64 MiB physical VMEM as well as v5e/v6e).
    row_bytes = NKNL * (2 * 1 + 4)          # 2x int8 (double buffer) + f32 temp
    pb_budget = max(32, (vmem_budget_bytes // row_bytes) // 32 * 32)
    if chunk is not None:
        pb = max(32, ((chunk + 31) // 32) * 32)
    else:
        pb = min(pb_budget, ((P + 31) // 32) * 32)
    num_chunks = -(-P // pb)
    P_pad = num_chunks * pb

    # ---- one-time prep (hoisted out of the per-call path) ----
    # Transpose each matrix (so the kernel matmul needs no in-kernel transpose),
    # flatten to lane-dense rows, zero-pad the chunk axis, store as int8.
    bt = np.transpose(basis, (0, 2, 1)).reshape(P, NKNL)
    bt = np.pad(bt, ((0, P_pad - P), (0, 0)))
    basis_prep = jnp.asarray(bt.astype(np.int8))     # (P_pad, n^k*n^l) int8 in HBM

    def forward(x, weights, basis_prep):
        B = x.shape[0]
        # Per-call weight prep is O(P): pad + reshape into lane-dense rows (f32).
        w = jnp.pad(weights.astype(jnp.float32), (0, P_pad - P))
        w = w.reshape(num_chunks, 1, pb)

        # TODO(synk): for production-scale n^l / n^k (>=128) keep the basis 3-D,
        # add a "parallel" grid axis over NL tiles (2 TensorCores on v7x) and
        # consider bf16 inputs to the final MXU dot; unnecessary at toy sizes.
        return pl.pallas_call(
            symm_equiv_kernel,
            out_shape=jax.ShapeDtypeStruct((B, NL), x.dtype),
            grid=(num_chunks,),
            in_specs=[
                pl.BlockSpec((1, 1, pb), lambda c: (c, 0, 0)),   # weight row (f32)
                pl.BlockSpec((B, NK), lambda c: (0, 0)),         # X (resident)
                pl.BlockSpec((pb, NKNL), lambda c: (c, 0)),      # basis chunk (int8)
            ],
            out_specs=pl.BlockSpec((B, NL), lambda c: (0, 0)),   # O (resident)
            scratch_shapes=[
                pltpu.VMEM((B, NL), jnp.float32),    # output accumulator
                pltpu.VMEM((NK, NL), jnp.float32),   # per-chunk W^T
            ],
            compiler_params=pltpu.CompilerParams(
                dimension_semantics=("arbitrary",),
                vmem_limit_bytes=vmem_budget_bytes + 8 * 2 ** 20,
            ),
        )(w, x, basis_prep)

    return jax.jit(forward), basis_prep


if __name__ == "__main__":
    # Small, module-consistent shapes: n=4, k=2, l=2 -> n^k = n^l = 16.
    n, k, l = 4, 2, 2
    batch = 8

    basis_np = build_basis_matrices(n, k, l, diag=True)   # (Bell(4)=15, 16, 16)
    P = basis_np.shape[0]

    key = jax.random.PRNGKey(0)
    kx, kw = jax.random.split(key)
    x = jax.random.normal(kx, (batch, n ** k), dtype=jnp.float32)
    # Matches PyTorch init: one scalar ~ N(0,1) per basis matrix.
    weights = jax.random.normal(kw, (P,), dtype=jnp.float32)

    # Module-init-style one-time prep, then the jitted forward.
    forward, basis_prep = build_symm_equiv_forward(basis_np)
    out = jax.block_until_ready(forward(x, weights, basis_prep))

    # Pure-JAX reference of the PyTorch forward.
    W_ref = jnp.einsum('p,pij->ij', weights, jnp.asarray(basis_np))
    ref = jnp.einsum('ij,kj->ki', W_ref, x)
    np.testing.assert_allclose(np.asarray(out), np.asarray(ref), rtol=1e-5, atol=1e-5)

    print("KERNEL_OK")
</pallas_src>

<mosaic_0001>
module attributes {stable_mosaic.version = 11 : i64} {
  func.func @symm_equiv_kernel(%arg0: i32, %arg1: memref<1x1x32xf32, #tpu.memory_space<vmem>>, %arg2: memref<8x16xf32, #tpu.memory_space<vmem>>, %arg3: memref<32x256xi8, #tpu.memory_space<vmem>>, %arg4: memref<8x16xf32, #tpu.memory_space<vmem>>, %arg5: memref<8x16xf32, #tpu.memory_space<vmem>>, %arg6: memref<16x16xf32, #tpu.memory_space<vmem>>) attributes {dimension_semantics = [#tpu.dimension_semantics<arbitrary>], iteration_bounds = array<i64: 1>, scalar_prefetch = 0 : i64, scratch_operands = 2 : i64, tpu.core_type = #tpu.core_type<tc>, window_params = [{transform_indices = @transform_0, window_bounds = array<i64: 1, 1, 32>}, {pipeline_mode = #tpu.pipeline_mode<synchronous>, transform_indices = @transform_1, window_bounds = array<i64: 8, 16>}, {transform_indices = @transform_2, window_bounds = array<i64: 32, 256>}, {pipeline_mode = #tpu.pipeline_mode<synchronous>, transform_indices = @transform_3, window_bounds = array<i64: 8, 16>}]} {
    %c0_i32 = arith.constant 0 : i32
    %0 = arith.cmpi eq, %arg0, %c0_i32 : i32
    %1 = arith.extui %0 : i1 to i32
    %c0_i32_0 = arith.constant 0 : i32
    %2 = arith.cmpi ne, %1, %c0_i32_0 : i32
    scf.if %2 {
      %cst_33 = arith.constant 0.000000e+00 : f32
      %49 = vector.broadcast %cst_33 : f32 to vector<8x16xf32>
      %c0_34 = arith.constant 0 : index
      %c0_35 = arith.constant 0 : index
      %50 = vector.load %arg5[%c0_34, %c0_35] : memref<8x16xf32, #tpu.memory_space<vmem>>, vector<8x16xf32>
      tpu.vector_store %arg5[%c0_34, %c0_35], %49 {strides = array<i32>} : memref<8x16xf32, #tpu.memory_space<vmem>>, vector<8x16xf32>,
    } else {
    }
    %c0 = arith.constant 0 : index
    %c0_1 = arith.constant 0 : index
    %c0_2 = arith.constant 0 : index
    %3 = vector.load %arg1[%c0, %c0_1, %c0_2] : memref<1x1x32xf32, #tpu.memory_space<vmem>>, vector<1x1x32xf32>
    %4 = vector.shape_cast %3 : vector<1x1x32xf32> to vector<1x32xf32>
    %c0_3 = arith.constant 0 : index
    %c0_4 = arith.constant 0 : index
    %5 = vector.load %arg3[%c0_3, %c0_4] : memref<32x256xi8, #tpu.memory_space<vmem>>, vector<32x256xi8>
    %6 = arith.sitofp %5 : vector<32x256xi8> to vector<32x256xf32>
    %cst = arith.constant dense<0.000000e+00> : vector<1x256xf32>
    %7 = tpu.matmul %4, %6, %cst {dimension_numbers = #tpu.dot_dimension_numbers<[1], [0], [0], [1], [0, 0, 1, 1], [], []>} : vector<1x32xf32>, vector<32x256xf32>, vector<1x256xf32> -> vector<1x256xf32>
    %8 = vector.extract_strided_slice %7 {offsets = [0, 0], sizes = [1, 16], strides = [1, 1]} : vector<1x256xf32> to vector<1x16xf32>
    %c0_5 = arith.constant 0 : index
    %c0_6 = arith.constant 0 : index
    %9 = vector.load %arg6[%c0_5, %c0_6] : memref<16x16xf32, #tpu.memory_space<vmem>>, vector<1x16xf32>
    tpu.vector_store %arg6[%c0_5, %c0_6], %8 {strides = array<i32>} : memref<16x16xf32, #tpu.memory_space<vmem>>, vector<1x16xf32>,
    %10 = vector.extract_strided_slice %7 {offsets = [0, 16], sizes = [1, 16], strides = [1, 1]} : vector<1x256xf32> to vector<1x16xf32>
    %c1 = arith.constant 1 : index
    %c0_7 = arith.constant 0 : index
    %11 = vector.load %arg6[%c1, %c0_7] : memref<16x16xf32, #tpu.memory_space<vmem>>, vector<1x16xf32>
    tpu.vector_store %arg6[%c1, %c0_7], %10 {strides = array<i32>} : memref<16x16xf32, #tpu.memory_space<vmem>>, vector<1x16xf32>,
    %12 = vector.extract_strided_slice %7 {offsets = [0, 32], sizes = [1, 16], strides = [1, 1]} : vector<1x256xf32> to vector<1x16xf32>
    %c2 = arith.constant 2 : index
    %c0_8 = arith.constant 0 : index
    %13 = vector.load %arg6[%c2, %c0_8] : memref<16x16xf32, #tpu.memory_space<vmem>>, vector<1x16xf32>
    tpu.vector_store %arg6[%c2, %c0_8], %12 {strides = array<i32>} : memref<16x16xf32, #tpu.memory_space<vmem>>, vector<1x16xf32>,
    %14 = vector.extract_strided_slice %7 {offsets = [0, 48], sizes = [1, 16], strides = [1, 1]} : vector<1x256xf32> to vector<1x16xf32>
    %c3 = arith.constant 3 : index
    %c0_9 = arith.constant 0 : index
    %15 = vector.load %arg6[%c3, %c0_9] : memref<16x16xf32, #tpu.memory_space<vmem>>, vector<1x16xf32>
    tpu.vector_store %arg6[%c3, %c0_9], %14 {strides = array<i32>} : memref<16x16xf32, #tpu.memory_space<vmem>>, vector<1x16xf32>,
    %16 = vector.extract_strided_slice %7 {offsets = [0, 64], sizes = [1, 16], strides = [1, 1]} : vector<1x256xf32> to vector<1x16xf32>
    %c4 = arith.constant 4 : index
    %c0_10 = arith.constant 0 : index
    %17 = vector.load %arg6[%c4, %c0_10] : memref<16x16xf32, #tpu.memory_space<vmem>>, vector<1x16xf32>
    tpu.vector_store %arg6[%c4, %c0_10], %16 {strides = array<i32>} : memref<16x16xf32, #tpu.memory_space<vmem>>, vector<1x16xf32>,
    %18 = vector.extract_strided_slice %7 {offsets = [0, 80], sizes = [1, 16], strides = [1, 1]} : vector<1x256xf32> to vector<1x16xf32>
    %c5 = arith.constant 5 : index
    %c0_11 = arith.constant 0 : index
    %19 = vector.load %arg6[%c5, %c0_11] : memref<16x16xf32, #tpu.memory_space<vmem>>, vector<1x16xf32>
    tpu.vector_store %arg6[%c5, %c0_11], %18 {strides = array<i32>} : memref<16x16xf32, #tpu.memory_space<vmem>>, vector<1x16xf32>,
    %20 = vector.extract_strided_slice %7 {offsets = [0, 96], sizes = [1, 16], strides = [1, 1]} : vector<1x256xf32> to vector<1x16xf32>
    %c6 = arith.constant 6 : index
    %c0_12 = arith.constant 0 : index
    %21 = vector.load %arg6[%c6, %c0_12] : memref<16x16xf32, #tpu.memory_space<vmem>>, vector<1x16xf32>
    tpu.vector_store %arg6[%c6, %c0_12], %20 {strides = array<i32>} : memref<16x16xf32, #tpu.memory_space<vmem>>, vector<1x16xf32>,
    %22 = vector.extract_strided_slice %7 {offsets = [0, 112], sizes = [1, 16], strides = [1, 1]} : vector<1x256xf32> to vector<1x16xf32>
    %c7 = arith.constant 7 : index
    %c0_13 = arith.constant 0 : index
    %23 = vector.load %arg6[%c7, %c0_13] : memref<16x16xf32, #tpu.memory_space<vmem>>, vector<1x16xf32>
    tpu.vector_store %arg6[%c7, %c0_13], %22 {strides = array<i32>} : memref<16x16xf32, #tpu.memory_space<vmem>>, vector<1x16xf32>,
    %24 = vector.extract_strided_slice %7 {offsets = [0, 128], sizes = [1, 16], strides = [1, 1]} : vector<1x256xf32> to vector<1x16xf32>
    %c8 = arith.constant 8 : index
    %c0_14 = arith.constant 0 : index
    %25 = vector.load %arg6[%c8, %c0_14] : memref<16x16xf32, #tpu.memory_space<vmem>>, vector<1x16xf32>
    tpu.vector_store %arg6[%c8, %c0_14], %24 {strides = array<i32>} : memref<16x16xf32, #tpu.memory_space<vmem>>, vector<1x16xf32>,
    %26 = vector.extract_strided_slice %7 {offsets = [0, 144], sizes = [1, 16], strides = [1, 1]} : vector<1x256xf32> to vector<1x16xf32>
    %c9 = arith.constant 9 : index
    %c0_15 = arith.constant 0 : index
    %27 = vector.load %arg6[%c9, %c0_15] : memref<16x16xf32, #tpu.memory_space<vmem>>, vector<1x16xf32>
    tpu.vector_store %arg6[%c9, %c0_15], %26 {strides = array<i32>} : memref<16x16xf32, #tpu.memory_space<vmem>>, vector<1x16xf32>,
    %28 = vector.extract_strided_slice %7 {offsets = [0, 160], sizes = [1, 16], strides = [1, 1]} : vector<1x256xf32> to vector<1x16xf32>
    %c10 = arith.constant 10 : index
    %c0_16 = arith.constant 0 : index
    %29 = vector.load %arg6[%c10, %c0_16] : memref<16x16xf32, #tpu.memory_space<vmem>>, vector<1x16xf32>
    tpu.vector_store %arg6[%c10, %c0_16], %28 {strides = array<i32>} : memref<16x16xf32, #tpu.memory_space<vmem>>, vector<1x16xf32>,
    %30 = vector.extract_strided_slice %7 {offsets = [0, 176], sizes = [1, 16], strides = [1, 1]} : vector<1x256xf32> to vector<1x16xf32>
    %c11 = arith.constant 11 : index
    %c0_17 = arith.constant 0 : index
    %31 = vector.load %arg6[%c11, %c0_17] : memref<16x16xf32, #tpu.memory_space<vmem>>, vector<1x16xf32>
    tpu.vector_store %arg6[%c11, %c0_17], %30 {strides = array<i32>} : memref<16x16xf32, #tpu.memory_space<vmem>>, vector<1x16xf32>,
    %32 = vector.extract_strided_slice %7 {offsets = [0, 192], sizes = [1, 16], strides = [1, 1]} : vector<1x256xf32> to vector<1x16xf32>
    %c12 = arith.constant 12 : index
    %c0_18 = arith.constant 0 : index
    %33 = vector.load %arg6[%c12, %c0_18] : memref<16x16xf32, #tpu.memory_space<vmem>>, vector<1x16xf32>
    tpu.vector_store %arg6[%c12, %c0_18], %32 {strides = array<i32>} : memref<16x16xf32, #tpu.memory_space<vmem>>, vector<1x16xf32>,
    %34 = vector.extract_strided_slice %7 {offsets = [0, 208], sizes = [1, 16], strides = [1, 1]} : vector<1x256xf32> to vector<1x16xf32>
    %c13 = arith.constant 13 : index
    %c0_19 = arith.constant 0 : index
    %35 = vector.load %arg6[%c13, %c0_19] : memref<16x16xf32, #tpu.memory_space<vmem>>, vector<1x16xf32>
    tpu.vector_store %arg6[%c13, %c0_19], %34 {strides = array<i32>} : memref<16x16xf32, #tpu.memory_space<vmem>>, vector<1x16xf32>,
    %36 = vector.extract_strided_slice %7 {offsets = [0, 224], sizes = [1, 16], strides = [1, 1]} : vector<1x256xf32> to vector<1x16xf32>
    %c14 = arith.constant 14 : index
    %c0_20 = arith.constant 0 : index
    %37 = vector.load %arg6[%c14, %c0_20] : memref<16x16xf32, #tpu.memory_space<vmem>>, vector<1x16xf32>
    tpu.vector_store %arg6[%c14, %c0_20], %36 {strides = array<i32>} : memref<16x16xf32, #tpu.memory_space<vmem>>, vector<1x16xf32>,
    %38 = vector.extract_strided_slice %7 {offsets = [0, 240], sizes = [1, 16], strides = [1, 1]} : vector<1x256xf32> to vector<1x16xf32>
    %c15 = arith.constant 15 : index
    %c0_21 = arith.constant 0 : index
    %39 = vector.load %arg6[%c15, %c0_21] : memref<16x16xf32, #tpu.memory_space<vmem>>, vector<1x16xf32>
    tpu.vector_store %arg6[%c15, %c0_21], %38 {strides = array<i32>} : memref<16x16xf32, #tpu.memory_space<vmem>>, vector<1x16xf32>,
    %c0_22 = arith.constant 0 : index
    %c0_23 = arith.constant 0 : index
    %40 = vector.load %arg5[%c0_22, %c0_23] : memref<8x16xf32, #tpu.memory_space<vmem>>, vector<8x16xf32>
    %c0_24 = arith.constant 0 : index
    %c0_25 = arith.constant 0 : index
    %41 = vector.load %arg2[%c0_24, %c0_25] : memref<8x16xf32, #tpu.memory_space<vmem>>, vector<8x16xf32>
    %c0_26 = arith.constant 0 : index
    %c0_27 = arith.constant 0 : index
    %42 = vector.load %arg6[%c0_26, %c0_27] : memref<16x16xf32, #tpu.memory_space<vmem>>, vector<16x16xf32>
    %cst_28 = arith.constant dense<0.000000e+00> : vector<8x16xf32>
    %43 = tpu.matmul %41, %42, %cst_28 {dimension_numbers = #tpu.dot_dimension_numbers<[1], [0], [0], [1], [0, 0, 1, 1], [], []>} : vector<8x16xf32>, vector<16x16xf32>, vector<8x16xf32> -> vector<8x16xf32>
    %44 = arith.addf %40, %43 : vector<8x16xf32>
    %c0_29 = arith.constant 0 : index
    %c0_30 = arith.constant 0 : index
    %45 = vector.load %arg5[%c0_29, %c0_30] : memref<8x16xf32, #tpu.memory_space<vmem>>, vector<8x16xf32>
    tpu.vector_store %arg5[%c0_29, %c0_30], %44 {strides = array<i32>} : memref<8x16xf32, #tpu.memory_space<vmem>>, vector<8x16xf32>,
    %c0_i32_31 = arith.constant 0 : i32
    %46 = arith.cmpi eq, %arg0, %c0_i32_31 : i32
    %47 = arith.extui %46 : i1 to i32
    %c0_i32_32 = arith.constant 0 : i32
    %48 = arith.cmpi ne, %47, %c0_i32_32 : i32
    scf.if %48 {
      %c0_33 = arith.constant 0 : index
      %c0_34 = arith.constant 0 : index
      %49 = vector.load %arg5[%c0_33, %c0_34] : memref<8x16xf32, #tpu.memory_space<vmem>>, vector<8x16xf32>
      %c0_35 = arith.constant 0 : index
      %c0_36 = arith.constant 0 : index
      %50 = vector.load %arg4[%c0_35, %c0_36] : memref<8x16xf32, #tpu.memory_space<vmem>>, vector<8x16xf32>
      tpu.vector_store %arg4[%c0_35, %c0_36], %49 {strides = array<i32>} : memref<8x16xf32, #tpu.memory_space<vmem>>, vector<8x16xf32>,
    } else {
    }
    return
  }
  func.func @transform_0(%arg0: i32) -> (i32, i32, i32) {
    %c0_i32 = arith.constant 0 : i32
    %c0_i32_0 = arith.constant 0 : i32
    %c0_i32_1 = arith.constant 0 : i32
    return %arg0, %c0_i32, %c0_i32_0 : i32, i32, i32
  }
  func.func @transform_1(%arg0: i32) -> (i32, i32) {
    %c0_i32 = arith.constant 0 : i32
    %c0_i32_0 = arith.constant 0 : i32
    %c0_i32_1 = arith.constant 0 : i32
    return %c0_i32, %c0_i32_0 : i32, i32
  }
  func.func @transform_2(%arg0: i32) -> (i32, i32) {
    %c0_i32 = arith.constant 0 : i32
    %c0_i32_0 = arith.constant 0 : i32
    return %arg0, %c0_i32 : i32, i32
  }
  func.func @transform_3(%arg0: i32) -> (i32, i32) {
    %c0_i32 = arith.constant 0 : i32
    %c0_i32_0 = arith.constant 0 : i32
    %c0_i32_1 = arith.constant 0 : i32
    return %c0_i32, %c0_i32_0 : i32, i32
  }
}

</mosaic_0001>

<llo_original>
// kernel: forward.1
$region0: #{forward.1}
  #allocation0 [shape = 'u32[]', space=smem, size = 0x4, offset = 0x4, fixed_abs, tag = 'smem constant byte address 0x4 - core index']
  #allocation1 [shape = 'u32[144,128]{1,0:T(1,128)}', space=vmem, size = 0x12000, scoped, tag = 'internal scratch']
  #allocation2 [shape = 'f32[8,16]{1,0:T(8,128)}', space=vmem, size = 0x1000, scoped, tag = 'scratch operand']
  #allocation3 [shape = 'f32[16,16]{1,0:T(8,128)}', space=vmem, size = 0x2000, scoped, tag = 'scratch operand']
  %s0 = inlined_call_operand.vmem [shape: f32[1,1,32], index: 0, kind: input, shape index: {}]
  %s1 = inlined_call_operand.hbm [shape: f32[8,16], index: 1, kind: input, shape index: {}]
  %s2 = inlined_call_operand.hbm [shape: s8[32,256], index: 2, kind: input, shape index: {}]
  %s3 = inlined_call_operand.hbm [shape: f32[8,16], index: 3, kind: output, shape index: {}]
  %s4 = sld [smem:[#allocation0]]
  $region38: #{forward.1} parent=0
    _
  %s6 = ssub.s32 1, %s4
  %s7 = scalar_select 0, %s6, %s4
  $region1: #{forward.1} parent=0
    #allocation4 [shape = 'u8[4096]{0}', space=vmem, size = 0x1000, scoped, tag = 'input window, operand 1, single buffered']
    #allocation5 [shape = 's32[1]{0}', space=sflag, size = 0x4, scoped, tag = 'scoped memory for forward.1']
    #allocation6 [shape = 's32[1]{0}', space=sflag, size = 0x4, scoped, tag = 'scoped memory for forward.1']
    #allocation7 [shape = 'u8[8192]{0}', space=vmem, size = 0x2000, scoped, tag = 'input window, operand 2, single buffered']
    #allocation8 [shape = 's32[1]{0}', space=sflag, size = 0x4, scoped, tag = 'scoped memory for forward.1']
    #allocation9 [shape = 'u8[4096]{0}', space=vmem, size = 0x1000, scoped, tag = 'output window, operand 0, single buffered']
    %8 = vsyncpa [#allocation5], 0
    %9 = vsyncpa [#allocation8], 0
    %10 = vsyncpa [#allocation6], 0
    // Predicated region
    $region2: #{forward.1} parent=1 // pred_check
      _
    $region3: #{forward.1} parent=1 // pred_check_branch
      %12 = sbr.rel (0) target = $region5
    $region4: #{forward.1} parent=1 // pred_region
      _
    $region5: #{forward.1} parent=1 // pred_fallthru
      _
    // Predicated region
    $region6: #{forward.1} parent=1 // pred_check
      _
    $region7: #{forward.1} parent=1 // pred_check_branch
      %14 = sbr.rel (0) target = $region9
    $region8: #{forward.1} parent=1 // pred_region
      %s16 = ssub.s32 128, 128
      %17 = vsyncadd [#allocation5], %s16
      %s19 = sshll.u32 [#allocation4], 4
      %s20 = int_to_ptr.vmem [resolvable:$true] %s19
      %22 = dma.hbm_to_vmem [thread:$0]  %s1, 128, %s20, [#allocation5]
    $region9: #{forward.1} parent=1 // pred_fallthru
      _
    // Predicated region
    $region10: #{forward.1} parent=1 // pred_check
      _
    $region11: #{forward.1} parent=1 // pred_check_branch
      %24 = sbr.rel (0) target = $region13
    $region12: #{forward.1} parent=1 // pred_region
      %s26 = ssub.s32 256, 256
      %27 = vsyncadd [#allocation8], %s26
      %s29 = sshll.u32 [#allocation7], 4
      %s30 = int_to_ptr.vmem [resolvable:$true] %s29
      %32 = dma.hbm_to_vmem [thread:$0]  %s2, 256, %s30, [#allocation8]
    $region13: #{forward.1} parent=1 // pred_fallthru
      _
    // Predicated region
    $region14: #{forward.1} parent=1 // pred_check
      _
    $region15: #{forward.1} parent=1 // pred_check_branch
      %34 = sbr.rel (0) target = $region17
    $region16: #{forward.1} parent=1 // pred_region
      %35 = dma.done [#allocation5], 128
    $region17: #{forward.1} parent=1 // pred_fallthru
      _
    // Predicated region
    $region18: #{forward.1} parent=1 // pred_check
      _
    $region19: #{forward.1} parent=1 // pred_check_branch
      %37 = sbr.rel (0) target = $region21
    $region20: #{forward.1} parent=1 // pred_region
      %38 = dma.done [#allocation8], 256
    $region21: #{forward.1} parent=1 // pred_fallthru
      _
    %p39 = scmp.eq.s32.totalorder 0, 0
    // Predicated region
    $region22: #{forward.1} parent=1 // pred_check
      %p40 = pneg %p39
    $region23: #{forward.1} parent=1 // pred_check_branch
      %42 = sbr.rel (%p40) target = $region25
    $region24: #{forward.1} parent=1 // pred_region
      %vm43 = vcmask 130048
      %44 = vst.msk [vmem:[#allocation2] sm:$0xff] %vm43, 0.0
    $region25: #{forward.1} parent=1 // pred_fallthru
      _
    %v45 = vld [vmem:[%s0] sm:$0x1]
    %v46 = vld [vmem:[#allocation7] sm:$0xff]
    %v47 = vld [vmem:[#allocation7 + $0x8] sm:$0xff]
    %v48 = vunpack.c.0.s8 %v46
    %v49 = vunpack.c.0.s8 %v47
    %v50 = vunpack.c.1.s8 %v46
    %v51 = vunpack.c.1.s8 %v47
    %v52 = vunpack.c.2.s8 %v46
    %v53 = vunpack.c.2.s8 %v47
    %v54 = vunpack.c.3.s8 %v46
    %v55 = vunpack.c.3.s8 %v47
    %v56 = vcvt.s32.f32 %v48
    %v57 = vcvt.s32.f32 %v49
    %v58 = vcvt.s32.f32 %v50
    %v59 = vcvt.s32.f32 %v51
    %v60 = vcvt.s32.f32 %v52
    %v61 = vcvt.s32.f32 %v53
    %v62 = vcvt.s32.f32 %v54
    %v63 = vcvt.s32.f32 %v55
    %vm64 = vcmask 261120
    %v66 = vsel %vm64, %v45, 0
    %68 = vmatprep.subr.mxu0 %v57
    %69 = vmatpush1.msra.mxu0 %v56
    %70 = vmatprep.subr.mxu0 %v59
    %71 = vmatpush1.msra.mxu0 %v58
    %72 = vmatprep.subr.mxu0 %v61
    %73 = vmatpush1.msra.mxu0 %v60
    %74 = vmatprep.subr.mxu0 %v63
    %75 = vmatpush1.msra.mxu0 %v62
    %76 = vmatprep.subr.mxu0 0.0
    %77 = vmatpush1.msra.mxu0 0.0
    %78 = vmatprep.subr.mxu0 0.0
    %79 = vmatpush1.msra.mxu0 0.0
    %80 = vmatprep.subr.mxu0 0.0
    %81 = vmatpush1.msra.mxu0 0.0
    %82 = vmatprep.subr.mxu0 0.0
    %83 = vmatpush1.msra.mxu0 0.0
    %84 = vmatprep.subr.mxu0 0.0
    %85 = vmatpush1.msra.mxu0 0.0
    %86 = vmatprep.subr.mxu0 0.0
    %87 = vmatpush1.msra.mxu0 0.0
    %88 = vmatprep.subr.mxu0 0.0
    %89 = vmatpush1.msra.mxu0 0.0
    %90 = vmatprep.subr.mxu0 0.0
    %91 = vmatpush1.msra.mxu0 0.0
    %92 = vmatprep.subr.mxu0 0.0
    %93 = vmatpush1.msra.mxu0 0.0
    %94 = vmatprep.subr.mxu0 0.0
    %95 = vmatpush1.msra.mxu0 0.0
    %96 = vmatprep.subr.mxu0 0.0
    %97 = vmatpush1.msra.mxu0 0.0
    %98 = vmatprep.subr.mxu0 0.0
    %99 = vmatpush1.msra.mxu0 0.0
    %100 = vmatprep.subr.mxu0 0.0
    %101 = vmatpush1.msra.mxu0 0.0
    %102 = vmatprep.subr.mxu0 0.0
    %103 = vmatpush1.msra.mxu0 0.0
    %104 = vmatprep.subr.mxu0 0.0
    %105 = vmatpush1.msra.mxu0 0.0
    %106 = vmatprep.subr.mxu0 0.0
    %107 = vmatpush1.msra.mxu0 0.0
    %108 = vmatprep.subr.mxu0 0.0
    %109 = vmatpush1.msra.mxu0 0.0
    %110 = vmatprep.subr.mxu0 0.0
    %111 = vmatpush1.msra.mxu0 0.0
    %112 = vmatprep.subr.mxu0 0.0
    %113 = vmatpush1.msra.mxu0 0.0
    %114 = vmatprep.subr.mxu0 0.0
    %115 = vmatpush1.msra.mxu0 0.0
    %116 = vmatprep.subr.mxu0 0.0
    %117 = vmatpush1.msra.mxu0 0.0
    %118 = vmatprep.subr.mxu0 0.0
    %119 = vmatpush1.msra.mxu0 0.0
    %120 = vmatprep.subr.mxu0 0.0
    %121 = vmatpush1.msra.mxu0 0.0
    %122 = vmatprep.subr.mxu0 0.0
    %123 = vmatpush1.msra.mxu0 0.0
    %124 = vmatprep.subr.mxu0 0.0
    %125 = vmatpush1.msra.mxu0 0.0
    %126 = vmatprep.subr.mxu0 0.0
    %127 = vmatpush1.msra.mxu0 0.0
    %128 = vmatprep.subr.mxu0 0.0
    %129 = vmatpush1.msra.mxu0 0.0
    %130 = vmatprep.subr.mxu0 0.0
    %131 = vmatpush1.msra.mxu0 0.0
    %132 = vmatprep.mubr.f32.mxu0 0.0
    %133 = vmatmul.mubr.f32.gmra.mrb[0].mxu0 %v66
    %v134 = vpop.f32.mrb[0].mxu0
    %v135 = vadd.f32 0.0, %v134
    %v136 = vpop.f32.mrb[0].mxu0
    %v137 = vadd.f32 0.0, %v136
    %138 = vdwg.mxu0
    %vm139 = vcmask 122880
    %140 = vst.msk [vmem:[#allocation3] sm:$0x1] %vm139, %v135
    %142 = vrot.lane.b32.xlu0 %v135, 112
    %v143 = vpop.permute.xlu0 %142
    %145 = vst.msk [vmem:[#allocation3 + $0x1] sm:$0x1] %vm139, %v143
    %146 = vrot.lane.b32.xlu0 %v135, 96
    %v147 = vpop.permute.xlu0 %146
    %149 = vst.msk [vmem:[#allocation3 + $0x2] sm:$0x1] %vm139, %v147
    %150 = vrot.lane.b32.xlu0 %v135, 80
    %v151 = vpop.permute.xlu0 %150
    %153 = vst.msk [vmem:[#allocation3 + $0x3] sm:$0x1] %vm139, %v151
    %154 = vrot.lane.b32.xlu0 %v135, 64
    %v155 = vpop.permute.xlu0 %154
    %157 = vst.msk [vmem:[#allocation3 + $0x4] sm:$0x1] %vm139, %v155
    %158 = vrot.lane.b32.xlu0 %v135, 48
    %v159 = vpop.permute.xlu0 %158
    %161 = vst.msk [vmem:[#allocation3 + $0x5] sm:$0x1] %vm139, %v159
    %162 = vrot.lane.b32.xlu0 %v135, 32
    %v163 = vpop.permute.xlu0 %162
    %165 = vst.msk [vmem:[#allocation3 + $0x6] sm:$0x1] %vm139, %v163
    %166 = vrot.lane.b32.xlu0 %v135, 16
    %v167 = vpop.permute.xlu0 %166
    %169 = vst.msk [vmem:[#allocation3 + $0x7] sm:$0x1] %vm139, %v167
    %170 = vst.msk [vmem:[#allocation3 + $0x8] sm:$0x1] %vm139, %v137
    %172 = vrot.lane.b32.xlu0 %v137, 112
    %v173 = vpop.permute.xlu0 %172
    %175 = vst.msk [vmem:[#allocation3 + $0x9] sm:$0x1] %vm139, %v173
    %176 = vrot.lane.b32.xlu0 %v137, 96
    %v177 = vpop.permute.xlu0 %176
    %179 = vst.msk [vmem:[#allocation3 + $0xa] sm:$0x1] %vm139, %v177
    %180 = vrot.lane.b32.xlu0 %v137, 80
    %v181 = vpop.permute.xlu0 %180
    %183 = vst.msk [vmem:[#allocation3 + $0xb] sm:$0x1] %vm139, %v181
    %184 = vrot.lane.b32.xlu0 %v137, 64
    %v185 = vpop.permute.xlu0 %184
    %187 = vst.msk [vmem:[#allocation3 + $0xc] sm:$0x1] %vm139, %v185
    %188 = vrot.lane.b32.xlu0 %v137, 48
    %v189 = vpop.permute.xlu0 %188
    %191 = vst.msk [vmem:[#allocation3 + $0xd] sm:$0x1] %vm139, %v189
    %192 = vrot.lane.b32.xlu0 %v137, 32
    %v193 = vpop.permute.xlu0 %192
    %195 = vst.msk [vmem:[#allocation3 + $0xe] sm:$0x1] %vm139, %v193
    %196 = vrot.lane.b32.xlu0 %v137, 16
    %v197 = vpop.permute.xlu0 %196
    %199 = vst.msk [vmem:[#allocation3 + $0xf] sm:$0x1] %vm139, %v197
    %v200 = vld [vmem:[#allocation2] sm:$0xff]
    %v201 = vld [vmem:[#allocation4] sm:$0xff]
    %v202 = vld [vmem:[#allocation3] sm:$0xff]
    %v203 = vld [vmem:[#allocation3 + $0x8] sm:$0xff]
    %vm204 = vcmask 130048
    %v206 = vsel %vm204, %v201, 0
    %208 = vmatprep.subr.mxu0 0.0
    %209 = vmatpush1.msra.mxu0 %v202
    %210 = vmatprep.subr.mxu0 0.0
    %211 = vmatpush1.msra.mxu0 %v203
    %212 = vmatprep.subr.mxu0 0.0
    %213 = vmatpush1.msra.mxu0 0.0
    %214 = vmatprep.subr.mxu0 0.0
    %215 = vmatpush1.msra.mxu0 0.0
    %216 = vmatprep.subr.mxu0 0.0
    %217 = vmatpush1.msra.mxu0 0.0
    %218 = vmatprep.subr.mxu0 0.0
    %219 = vmatpush1.msra.mxu0 0.0
    %220 = vmatprep.subr.mxu0 0.0
    %221 = vmatpush1.msra.mxu0 0.0
    %222 = vmatprep.subr.mxu0 0.0
    %223 = vmatpush1.msra.mxu0 0.0
    %224 = vmatprep.subr.mxu0 0.0
    %225 = vmatpush1.msra.mxu0 0.0
    %226 = vmatprep.subr.mxu0 0.0
    %227 = vmatpush1.msra.mxu0 0.0
    %228 = vmatprep.subr.mxu0 0.0
    %229 = vmatpush1.msra.mxu0 0.0
    %230 = vmatprep.subr.mxu0 0.0
    %231 = vmatpush1.msra.mxu0 0.0
    %232 = vmatprep.subr.mxu0 0.0
    %233 = vmatpush1.msra.mxu0 0.0
    %234 = vmatprep.subr.mxu0 0.0
    %235 = vmatpush1.msra.mxu0 0.0
    %236 = vmatprep.subr.mxu0 0.0
    %237 = vmatpush1.msra.mxu0 0.0
    %238 = vmatprep.subr.mxu0 0.0
    %239 = vmatpush1.msra.mxu0 0.0
    %240 = vmatprep.subr.mxu0 0.0
    %241 = vmatpush1.msra.mxu0 0.0
    %242 = vmatprep.subr.mxu0 0.0
    %243 = vmatpush1.msra.mxu0 0.0
    %244 = vmatprep.subr.mxu0 0.0
    %245 = vmatpush1.msra.mxu0 0.0
    %246 = vmatprep.subr.mxu0 0.0
    %247 = vmatpush1.msra.mxu0 0.0
    %248 = vmatprep.subr.mxu0 0.0
    %249 = vmatpush1.msra.mxu0 0.0
    %250 = vmatprep.subr.mxu0 0.0
    %251 = vmatpush1.msra.mxu0 0.0
    %252 = vmatprep.subr.mxu0 0.0
    %253 = vmatpush1.msra.mxu0 0.0
    %254 = vmatprep.subr.mxu0 0.0
    %255 = vmatpush1.msra.mxu0 0.0
    %256 = vmatprep.subr.mxu0 0.0
    %257 = vmatpush1.msra.mxu0 0.0
    %258 = vmatprep.subr.mxu0 0.0
    %259 = vmatpush1.msra.mxu0 0.0
    %260 = vmatprep.subr.mxu0 0.0
    %261 = vmatpush1.msra.mxu0 0.0
    %262 = vmatprep.subr.mxu0 0.0
    %263 = vmatpush1.msra.mxu0 0.0
    %264 = vmatprep.subr.mxu0 0.0
    %265 = vmatpush1.msra.mxu0 0.0
    %266 = vmatprep.subr.mxu0 0.0
    %267 = vmatpush1.msra.mxu0 0.0
    %268 = vmatprep.subr.mxu0 0.0
    %269 = vmatpush1.msra.mxu0 0.0
    %270 = vmatprep.subr.mxu0 0.0
    %271 = vmatpush1.msra.mxu0 0.0
    %272 = vmatprep.mubr.f32.mxu0 0.0
    %273 = vmatmul.mubr.f32.gmra.mrb[0].mxu0 %v206
    %v274 = vpop.f32.mrb[0].mxu0
    %v275 = vadd.f32 0.0, %v274
    %v276 = vpop.f32.mrb[0].mxu0
    %277 = vdwg.mxu0
    %v278 = vadd.f32 %v200, %v275
    %279 = vst.msk [vmem:[#allocation2] sm:$0xff] %vm204, %v278
    // Predicated region
    $region26: #{forward.1} parent=1 // pred_check
      %p280 = pneg %p39
    $region27: #{forward.1} parent=1 // pred_check_branch
      %282 = sbr.rel (%p280) target = $region29
    $region28: #{forward.1} parent=1 // pred_region
      %v283 = vld [vmem:[#allocation2] sm:$0xff]
      %284 = vst.msk [vmem:[#allocation9] sm:$0xff] %vm204, %v283
    $region29: #{forward.1} parent=1 // pred_fallthru
      _
    // Predicated region
    $region30: #{forward.1} parent=1 // pred_check
      _
    $region31: #{forward.1} parent=1 // pred_check_branch
      %286 = sbr.rel (0) target = $region33
    $region32: #{forward.1} parent=1 // pred_region
      %s288 = ssub.s32 128, 128
      %289 = vsyncadd [#allocation6], %s288
      %s291 = sshll.u32 [#allocation9], 4
      %s292 = int_to_ptr.vmem [resolvable:$true] %s291
      %294 = dma.vmem_to_hbm [thread:$0]  %s292, 128, %s3, [#allocation6]
    $region33: #{forward.1} parent=1 // pred_fallthru
      _
    // Predicated region
    $region34: #{forward.1} parent=1 // pred_check
      _
    $region35: #{forward.1} parent=1 // pred_check_branch
      %296 = sbr.rel (0) target = $region37
    $region36: #{forward.1} parent=1 // pred_region
      %297 = dma.done [#allocation6], 128
    $region37: #{forward.1} parent=1 // pred_fallthru
      _
    %298 = vsyncpa [#allocation5], 1
    %299 = vsyncpa [#allocation8], 1
    %300 = vsyncpa [#allocation6], 1

</llo_original>
